<compile_context>
chip_gen: v5e
topology: v5e:2x2
jax: 0.10.0
libtpu: 0.0.40
codegen_flags: <defaults>
</compile_context>

<pallas_src>
import jax
import jax.numpy as jnp
from jax.experimental import pallas as pl
from jax.experimental.pallas import tpu as pltpu

K = 5            # MaskConv2 kernel size
PAD = K // 2     # 'same' padding
NT = PAD + 1     # row taps surviving the causal mask (kh = 0..PAD)


# --------------------------------------------------------------------------
# Pallas kernel: whole residual block for Bt batch elements per grid step.
# --------------------------------------------------------------------------
def _entropy_residual_kernel(xin_ref, w1_ref, b1_ref, a1_ref,
                             w2_ref, b2_ref, a2_ref,
                             out_ref, ysc_ref):
    Bt, H, WC = out_ref.shape            # WC = W * C (lane-dense row width)

    xin = xin_ref[...]                   # (Bt, H+PAD, WC): 2 zero rows on top

    # Zero the 8 border rows of the conv-2 scratch every step (aligned 8-row
    # store, ~KBs).  Unconditional (not pl.when(pid==0)-guarded) so it stays
    # correct if the batch axis is megacore-sharded.
    ysc_ref[:, 0:8, :] = jnp.zeros((Bt, 8, WC), jnp.float32)

    # ---- masked conv #1: 3 row-shifted lane-dense views -> one MXU dot ----
    x_rows = [xin[:, kh:kh + H, :].reshape(Bt * H, WC) for kh in range(NT)]
    x_taps = jnp.concatenate(x_rows, axis=-1)            # (Bt*H, NT*WC)
    acc1 = jnp.dot(x_taps, w1_ref[...],
                   preferred_element_type=jnp.float32) + b1_ref[...]
    y = jnp.where(acc1 > 0, acc1, a1_ref[...] * acc1)    # PReLU #1 (per chan)

    # ---- stage y into the zero-bordered scratch (sublane-aligned write) ----
    ysc_ref[:, 8:8 + H, :] = y.reshape(Bt, H, WC)

    # ---- masked conv #2 (reads rows 6..23: 2 zero rows + y) ----
    y_rows = [ysc_ref[:, 6 + kh:6 + kh + H, :].reshape(Bt * H, WC)
              for kh in range(NT)]
    y_taps = jnp.concatenate(y_rows, axis=-1)             # (Bt*H, NT*WC)
    acc2 = jnp.dot(y_taps, w2_ref[...],
                   preferred_element_type=jnp.float32) + b2_ref[...]
    z = jnp.where(acc2 > 0, acc2, a2_ref[...] * acc2)     # PReLU #2

    # ---- residual add (kh == PAD view is exactly the unpadded input) ----
    out_ref[...] = (z + x_rows[PAD]).reshape(Bt, H, WC)


# --------------------------------------------------------------------------
# Wrapper: NCHW <-> lane-dense (B, H, W*C), row padding, pallas_call plumbing.
# --------------------------------------------------------------------------
def entropy_residual_block(x_nchw, bw1, b1, a1, bw2, b2, a2, *, bt=None):
    B, C, H, W = x_nchw.shape
    WC = W * C

    # NCHW -> NHWC -> lane-dense rows; prepend the 2 zero rows (top row pad).
    x = jnp.transpose(x_nchw, (0, 2, 3, 1)).astype(jnp.float32).reshape(B, H, WC)
    x_in = jnp.pad(x, ((0, 0), (PAD, 0), (0, 0)))          # (B, H+PAD, WC)

    if bt is None:
        bt = next(d for d in (8, 4, 2, 1) if B % d == 0)

    # Lane-dense per-channel bias / PReLU slope: index w*C + c -> param[c].
    b1r = jnp.tile(b1.astype(jnp.float32), W).reshape(1, WC)
    a1r = jnp.tile(a1.astype(jnp.float32), W).reshape(1, WC)
    b2r = jnp.tile(b2.astype(jnp.float32), W).reshape(1, WC)
    a2r = jnp.tile(a2.astype(jnp.float32), W).reshape(1, WC)

    out = pl.pallas_call(
        _entropy_residual_kernel,
        out_shape=jax.ShapeDtypeStruct((B, H, WC), jnp.float32),
        grid_spec=pltpu.PrefetchScalarGridSpec(
            num_scalar_prefetch=0,
            grid=(B // bt,),
            in_specs=[
                pl.BlockSpec((bt, H + PAD, WC), lambda i: (i, 0, 0)),
                pl.BlockSpec((NT * WC, WC), lambda i: (0, 0)),
                pl.BlockSpec((1, WC), lambda i: (0, 0)),
                pl.BlockSpec((1, WC), lambda i: (0, 0)),
                pl.BlockSpec((NT * WC, WC), lambda i: (0, 0)),
                pl.BlockSpec((1, WC), lambda i: (0, 0)),
                pl.BlockSpec((1, WC), lambda i: (0, 0)),
            ],
            out_specs=pl.BlockSpec((bt, H, WC), lambda i: (i, 0, 0)),
            scratch_shapes=[pltpu.VMEM((bt, 8 + H, WC), jnp.float32)],
        ),
        compiler_params=pltpu.CompilerParams(
            dimension_semantics=("parallel",),
            vmem_limit_bytes=32 * 1024 * 1024),
    )(x_in, bw1, b1r, a1r, bw2, b2r, a2r)

    return jnp.transpose(out.reshape(B, H, W, C), (0, 3, 1, 2))   # back to NCHW


# --------------------------------------------------------------------------
# Deterministic parameter construction (mimics MaskConv2 / PReLU __init__).
# --------------------------------------------------------------------------
def _causal_mask(k, include_center=True):
    c = k // 2
    rows = []
    for i in range(k):
        row = []
        for j in range(k):
            keep = (i < c) or (i == c and (j < c or (j == c and include_center)))
            row.append(1.0 if keep else 0.0)
        rows.append(row)
    return jnp.array(rows, jnp.float32)


def init_params(key, ngroups, cpn):
    C = ngroups * cpn
    k1, k2, k3, k4, k5, k6 = jax.random.split(key, 6)
    bound = 1.0 / float((cpn * K * K) ** 0.5)
    mask = _causal_mask(K, include_center=True)   # type-'B' masked conv

    def conv_w(k):
        w = jax.random.uniform(k, (C, cpn, K, K), jnp.float32, -bound, bound)
        return w * mask[None, None, :, :]

    w1, w2 = conv_w(k1), conv_w(k3)
    b1 = jax.random.uniform(k2, (C,), jnp.float32, -bound, bound)
    b2 = jax.random.uniform(k4, (C,), jnp.float32, -bound, bound)
    a1 = 0.25 + 0.05 * jax.random.normal(k5, (C,), jnp.float32)   # PReLU slopes
    a2 = 0.25 + 0.05 * jax.random.normal(k6, (C,), jnp.float32)
    return w1, b1, a1, w2, b2, a2


def grouped_to_banded(w, ngroups, cpn, w_img):
    """(C_out, cpn, K, K) masked grouped weight -> (NT*W*C, W*C) banded matrix.

    Row index = kh*W*C + q*C + ci  (kh: surviving row tap, q: input column),
    col index = w*C + co.  Column taps and column 'same' padding are folded
    into the band; group structure becomes block-diagonal within each C x C
    sub-block.  Zero-masked taps never appear.
    """
    C = ngroups * cpn
    # Dense per-tap (K, K, C_in, C_out) weight, block-diagonal over groups.
    wd = jnp.zeros((K, K, C, C), jnp.float32)
    for g in range(ngroups):
        blk = jnp.transpose(w[g * cpn:(g + 1) * cpn], (2, 3, 1, 0))  # (K,K,ci,co)
        wd = wd.at[:, :, g * cpn:(g + 1) * cpn, g * cpn:(g + 1) * cpn].set(blk)
    # Column-band selector: sel[q, w, kw] = 1 iff q - w + PAD == kw.
    q = jnp.arange(w_img)[:, None, None]
    wo = jnp.arange(w_img)[None, :, None]
    kw = jnp.arange(K)[None, None, :]
    sel = (q - wo + PAD == kw).astype(jnp.float32)
    # m[kh, q, ci, w, co] = sum_kw sel[q,w,kw] * wd[kh,kw,ci,co]
    m = jnp.einsum('qwk,hkic->hqiwc', sel, wd[:NT])
    return m.reshape(NT * w_img * C, w_img * C)


# --------------------------------------------------------------------------
# Pure-JAX reference for verification.
# --------------------------------------------------------------------------
def ref_forward(x, w1, b1, a1, w2, b2, a2, ngroups):
    def conv(inp, w, b):
        y = jax.lax.conv_general_dilated(
            inp, w, window_strides=(1, 1), padding=((PAD, PAD), (PAD, PAD)),
            dimension_numbers=('NCHW', 'OIHW', 'NCHW'),
            feature_group_count=ngroups)
        return y + b[None, :, None, None]

    def prelu(v, a):
        return jnp.where(v > 0, v, a[None, :, None, None] * v)

    y = prelu(conv(x, w1, b1), a1)
    y = prelu(conv(y, w2, b2), a2)
    return y + x


if __name__ == "__main__":
    ngroups, cpn = 2, 4
    B, H, W = 2, 16, 16
    C = ngroups * cpn

    key = jax.random.PRNGKey(0)
    kx, kp = jax.random.split(key)
    x = jax.random.normal(kx, (B, C, H, W), jnp.float32)     # NCHW, like PyTorch

    w1, b1, a1, w2, b2, a2 = init_params(kp, ngroups, cpn)
    bw1 = grouped_to_banded(w1, ngroups, cpn, W)
    bw2 = grouped_to_banded(w2, ngroups, cpn, W)

    out = entropy_residual_block(x, bw1, b1, a1, bw2, b2, a2)
    out = jax.block_until_ready(out)

    ref = jax.block_until_ready(ref_forward(x, w1, b1, a1, w2, b2, a2, ngroups))
    assert out.shape == ref.shape == (B, C, H, W)
    err = float(jnp.max(jnp.abs(out - ref)))
    assert jnp.allclose(out, ref, atol=1e-4, rtol=1e-4), f"max err {err}"

    print("KERNEL_OK")
</pallas_src>

<mosaic_0001>
module attributes {stable_mosaic.version = 11 : i64} {
  func.func @_entropy_residual_kernel(%arg0: i32, %arg1: memref<2x18x128xf32, #tpu.memory_space<vmem>>, %arg2: memref<384x128xf32, #tpu.memory_space<vmem>>, %arg3: memref<1x128xf32, #tpu.memory_space<vmem>>, %arg4: memref<1x128xf32, #tpu.memory_space<vmem>>, %arg5: memref<384x128xf32, #tpu.memory_space<vmem>>, %arg6: memref<1x128xf32, #tpu.memory_space<vmem>>, %arg7: memref<1x128xf32, #tpu.memory_space<vmem>>, %arg8: memref<2x16x128xf32, #tpu.memory_space<vmem>>, %arg9: memref<2x24x128xf32, #tpu.memory_space<vmem>>) attributes {dimension_semantics = [#tpu.dimension_semantics<parallel>], iteration_bounds = array<i64: 1>, scalar_prefetch = 0 : i64, scratch_operands = 1 : i64, tpu.core_type = #tpu.core_type<tc>, window_params = [{transform_indices = @transform_0, window_bounds = array<i64: 2, 18, 128>}, {pipeline_mode = #tpu.pipeline_mode<synchronous>, transform_indices = @transform_1, window_bounds = array<i64: 384, 128>}, {pipeline_mode = #tpu.pipeline_mode<synchronous>, transform_indices = @transform_2, window_bounds = array<i64: 1, 128>}, {pipeline_mode = #tpu.pipeline_mode<synchronous>, transform_indices = @transform_3, window_bounds = array<i64: 1, 128>}, {pipeline_mode = #tpu.pipeline_mode<synchronous>, transform_indices = @transform_4, window_bounds = array<i64: 384, 128>}, {pipeline_mode = #tpu.pipeline_mode<synchronous>, transform_indices = @transform_5, window_bounds = array<i64: 1, 128>}, {pipeline_mode = #tpu.pipeline_mode<synchronous>, transform_indices = @transform_6, window_bounds = array<i64: 1, 128>}, {transform_indices = @transform_7, window_bounds = array<i64: 2, 16, 128>}]} {
    %c0 = arith.constant 0 : index
    %c0_0 = arith.constant 0 : index
    %c0_1 = arith.constant 0 : index
    %0 = vector.load %arg1[%c0, %c0_0, %c0_1] : memref<2x18x128xf32, #tpu.memory_space<vmem>>, vector<2x18x128xf32>
    %cst = arith.constant 0.000000e+00 : f32
    %1 = vector.broadcast %cst : f32 to vector<2x8x128xf32>
    %c0_2 = arith.constant 0 : index
    %c0_3 = arith.constant 0 : index
    %c0_4 = arith.constant 0 : index
    %2 = vector.load %arg9[%c0_2, %c0_3, %c0_4] : memref<2x24x128xf32, #tpu.memory_space<vmem>>, vector<2x8x128xf32>
    tpu.vector_store %arg9[%c0_2, %c0_3, %c0_4], %1 {strides = array<i32>} : memref<2x24x128xf32, #tpu.memory_space<vmem>>, vector<2x8x128xf32>,
    %3 = vector.extract_strided_slice %0 {offsets = [0, 0, 0], sizes = [2, 16, 128], strides = [1, 1, 1]} : vector<2x18x128xf32> to vector<2x16x128xf32>
    %4 = vector.shape_cast %3 : vector<2x16x128xf32> to vector<32x128xf32>
    %5 = vector.extract_strided_slice %0 {offsets = [0, 1, 0], sizes = [2, 16, 128], strides = [1, 1, 1]} : vector<2x18x128xf32> to vector<2x16x128xf32>
    %6 = vector.shape_cast %5 : vector<2x16x128xf32> to vector<32x128xf32>
    %7 = vector.extract_strided_slice %0 {offsets = [0, 2, 0], sizes = [2, 16, 128], strides = [1, 1, 1]} : vector<2x18x128xf32> to vector<2x16x128xf32>
    %8 = vector.shape_cast %7 : vector<2x16x128xf32> to vector<32x128xf32>
    %9 = tpu.concatenate %4, %6, %8 in 1 : vector<32x128xf32>, vector<32x128xf32>, vector<32x128xf32> -> vector<32x384xf32>
    %c0_5 = arith.constant 0 : index
    %c0_6 = arith.constant 0 : index
    %10 = vector.load %arg2[%c0_5, %c0_6] : memref<384x128xf32, #tpu.memory_space<vmem>>, vector<384x128xf32>
    %cst_7 = arith.constant dense<0.000000e+00> : vector<32x128xf32>
    %11 = tpu.matmul %9, %10, %cst_7 {dimension_numbers = #tpu.dot_dimension_numbers<[1], [0], [0], [1], [0, 0, 1, 1], [], []>} : vector<32x384xf32>, vector<384x128xf32>, vector<32x128xf32> -> vector<32x128xf32>
    %c0_8 = arith.constant 0 : index
    %c0_9 = arith.constant 0 : index
    %12 = vector.load %arg3[%c0_8, %c0_9] : memref<1x128xf32, #tpu.memory_space<vmem>>, vector<1x128xf32>
    %13 = vector.broadcast %12 : vector<1x128xf32> to vector<32x128xf32>
    %14 = arith.addf %11, %13 : vector<32x128xf32>
    %cst_10 = arith.constant 0.000000e+00 : f32
    %15 = vector.broadcast %cst_10 : f32 to vector<32x128xf32>
    %16 = arith.cmpf ogt, %14, %15 : vector<32x128xf32>
    %c0_11 = arith.constant 0 : index
    %c0_12 = arith.constant 0 : index
    %17 = vector.load %arg4[%c0_11, %c0_12] : memref<1x128xf32, #tpu.memory_space<vmem>>, vector<1x128xf32>
    %18 = vector.broadcast %17 : vector<1x128xf32> to vector<32x128xf32>
    %19 = arith.mulf %18, %14 : vector<32x128xf32>
    %20 = arith.select %16, %14, %19 : vector<32x128xi1>, vector<32x128xf32>
    %21 = vector.shape_cast %20 : vector<32x128xf32> to vector<2x16x128xf32>
    %c0_13 = arith.constant 0 : index
    %c8 = arith.constant 8 : index
    %c0_14 = arith.constant 0 : index
    %22 = vector.load %arg9[%c0_13, %c8, %c0_14] : memref<2x24x128xf32, #tpu.memory_space<vmem>>, vector<2x16x128xf32>
    tpu.vector_store %arg9[%c0_13, %c8, %c0_14], %21 {strides = array<i32>} : memref<2x24x128xf32, #tpu.memory_space<vmem>>, vector<2x16x128xf32>,
    %c0_15 = arith.constant 0 : index
    %c6 = arith.constant 6 : index
    %c0_16 = arith.constant 0 : index
    %23 = vector.load %arg9[%c0_15, %c6, %c0_16] : memref<2x24x128xf32, #tpu.memory_space<vmem>>, vector<2x16x128xf32>
    %24 = vector.shape_cast %23 : vector<2x16x128xf32> to vector<32x128xf32>
    %c0_17 = arith.constant 0 : index
    %c7 = arith.constant 7 : index
    %c0_18 = arith.constant 0 : index
    %25 = vector.load %arg9[%c0_17, %c7, %c0_18] : memref<2x24x128xf32, #tpu.memory_space<vmem>>, vector<2x16x128xf32>
    %26 = vector.shape_cast %25 : vector<2x16x128xf32> to vector<32x128xf32>
    %c0_19 = arith.constant 0 : index
    %c8_20 = arith.constant 8 : index
    %c0_21 = arith.constant 0 : index
    %27 = vector.load %arg9[%c0_19, %c8_20, %c0_21] : memref<2x24x128xf32, #tpu.memory_space<vmem>>, vector<2x16x128xf32>
    %28 = vector.shape_cast %27 : vector<2x16x128xf32> to vector<32x128xf32>
    %29 = tpu.concatenate %24, %26, %28 in 1 : vector<32x128xf32>, vector<32x128xf32>, vector<32x128xf32> -> vector<32x384xf32>
    %c0_22 = arith.constant 0 : index
    %c0_23 = arith.constant 0 : index
    %30 = vector.load %arg5[%c0_22, %c0_23] : memref<384x128xf32, #tpu.memory_space<vmem>>, vector<384x128xf32>
    %cst_24 = arith.constant dense<0.000000e+00> : vector<32x128xf32>
    %31 = tpu.matmul %29, %30, %cst_24 {dimension_numbers = #tpu.dot_dimension_numbers<[1], [0], [0], [1], [0, 0, 1, 1], [], []>} : vector<32x384xf32>, vector<384x128xf32>, vector<32x128xf32> -> vector<32x128xf32>
    %c0_25 = arith.constant 0 : index
    %c0_26 = arith.constant 0 : index
    %32 = vector.load %arg6[%c0_25, %c0_26] : memref<1x128xf32, #tpu.memory_space<vmem>>, vector<1x128xf32>
    %33 = vector.broadcast %32 : vector<1x128xf32> to vector<32x128xf32>
    %34 = arith.addf %31, %33 : vector<32x128xf32>
    %cst_27 = arith.constant 0.000000e+00 : f32
    %35 = vector.broadcast %cst_27 : f32 to vector<32x128xf32>
    %36 = arith.cmpf ogt, %34, %35 : vector<32x128xf32>
    %c0_28 = arith.constant 0 : index
    %c0_29 = arith.constant 0 : index
    %37 = vector.load %arg7[%c0_28, %c0_29] : memref<1x128xf32, #tpu.memory_space<vmem>>, vector<1x128xf32>
    %38 = vector.broadcast %37 : vector<1x128xf32> to vector<32x128xf32>
    %39 = arith.mulf %38, %34 : vector<32x128xf32>
    %40 = arith.select %36, %34, %39 : vector<32x128xi1>, vector<32x128xf32>
    %41 = arith.addf %40, %8 : vector<32x128xf32>
    %42 = vector.shape_cast %41 : vector<32x128xf32> to vector<2x16x128xf32>
    %c0_30 = arith.constant 0 : index
    %c0_31 = arith.constant 0 : index
    %c0_32 = arith.constant 0 : index
    %43 = vector.load %arg8[%c0_30, %c0_31, %c0_32] : memref<2x16x128xf32, #tpu.memory_space<vmem>>, vector<2x16x128xf32>
    tpu.vector_store %arg8[%c0_30, %c0_31, %c0_32], %42 {strides = array<i32>} : memref<2x16x128xf32, #tpu.memory_space<vmem>>, vector<2x16x128xf32>,
    return
  }
  func.func @transform_0(%arg0: i32) -> (i32, i32, i32) {
    %c0_i32 = arith.constant 0 : i32
    %c0_i32_0 = arith.constant 0 : i32
    %c0_i32_1 = arith.constant 0 : i32
    return %arg0, %c0_i32, %c0_i32_0 : i32, i32, i32
  }
  func.func @transform_1(%arg0: i32) -> (i32, i32) {
    %c0_i32 = arith.constant 0 : i32
    %c0_i32_0 = arith.constant 0 : i32
    %c0_i32_1 = arith.constant 0 : i32
    return %c0_i32, %c0_i32_0 : i32, i32
  }
  func.func @transform_2(%arg0: i32) -> (i32, i32) {
    %c0_i32 = arith.constant 0 : i32
    %c0_i32_0 = arith.constant 0 : i32
    %c0_i32_1 = arith.constant 0 : i32
    return %c0_i32, %c0_i32_0 : i32, i32
  }
  func.func @transform_3(%arg0: i32) -> (i32, i32) {
    %c0_i32 = arith.constant 0 : i32
    %c0_i32_0 = arith.constant 0 : i32
    %c0_i32_1 = arith.constant 0 : i32
    return %c0_i32, %c0_i32_0 : i32, i32
  }
  func.func @transform_4(%arg0: i32) -> (i32, i32) {
    %c0_i32 = arith.constant 0 : i32
    %c0_i32_0 = arith.constant 0 : i32
    %c0_i32_1 = arith.constant 0 : i32
    return %c0_i32, %c0_i32_0 : i32, i32
  }
  func.func @transform_5(%arg0: i32) -> (i32, i32) {
    %c0_i32 = arith.constant 0 : i32
    %c0_i32_0 = arith.constant 0 : i32
    %c0_i32_1 = arith.constant 0 : i32
    return %c0_i32, %c0_i32_0 : i32, i32
  }
  func.func @transform_6(%arg0: i32) -> (i32, i32) {
    %c0_i32 = arith.constant 0 : i32
    %c0_i32_0 = arith.constant 0 : i32
    %c0_i32_1 = arith.constant 0 : i32
    return %c0_i32, %c0_i32_0 : i32, i32
  }
  func.func @transform_7(%arg0: i32) -> (i32, i32, i32) {
    %c0_i32 = arith.constant 0 : i32
    %c0_i32_0 = arith.constant 0 : i32
    %c0_i32_1 = arith.constant 0 : i32
    return %arg0, %c0_i32, %c0_i32_0 : i32, i32, i32
  }
}

</mosaic_0001>

<llo_original>
// kernel: tpu_custom_call.1
$region0: #{tpu_custom_call.1}
  #allocation0 [shape = 'u32[]', space=smem, size = 0x4, offset = 0x4, fixed_abs, tag = 'smem constant byte address 0x4 - core index']
  #allocation1 [shape = 'u32[72,128]{1,0:T(1,128)}', space=vmem, size = 0x9000, scoped, tag = 'internal scratch']
  #allocation2 [shape = 'f32[2,24,128]{2,1,0:T(8,128)}', space=vmem, size = 0x6000, scoped, tag = 'scratch operand']
  %s0 = inlined_call_operand.vmem [shape: f32[2,18,128], index: 0, kind: input, shape index: {}]
  %s1 = inlined_call_operand.hbm [shape: f32[384,128], index: 1, kind: input, shape index: {}]
  %s2 = inlined_call_operand.vmem [shape: f32[1,128], index: 2, kind: input, shape index: {}]
  %s3 = inlined_call_operand.vmem [shape: f32[1,128], index: 3, kind: input, shape index: {}]
  %s4 = inlined_call_operand.hbm [shape: f32[384,128], index: 4, kind: input, shape index: {}]
  %s5 = inlined_call_operand.vmem [shape: f32[1,128], index: 5, kind: input, shape index: {}]
  %s6 = inlined_call_operand.vmem [shape: f32[1,128], index: 6, kind: input, shape index: {}]
  %s7 = inlined_call_operand.hbm [shape: f32[2,16,128], index: 7, kind: output, shape index: {}]
  %s8 = sld [smem:[#allocation0]]
  $region46: #{tpu_custom_call.1} parent=0
    _
  %s10 = ssub.s32 1, %s8
  %s11 = scalar_select 0, %s10, %s8
  $region1: #{tpu_custom_call.1} parent=0
    #allocation3 [shape = 'u8[196608]{0}', space=vmem, size = 0x30000, scoped, tag = 'input window, operand 1, single buffered']
    #allocation4 [shape = 's32[1]{0}', space=sflag, size = 0x4, scoped, tag = 'scoped memory for tpu_custom_call.1']
    #allocation5 [shape = 's32[1]{0}', space=sflag, size = 0x4, scoped, tag = 'scoped memory for tpu_custom_call.1']
    #allocation6 [shape = 'u8[196608]{0}', space=vmem, size = 0x30000, scoped, tag = 'input window, operand 4, single buffered']
    #allocation7 [shape = 's32[1]{0}', space=sflag, size = 0x4, scoped, tag = 'scoped memory for tpu_custom_call.1']
    #allocation8 [shape = 'u8[16384]{0}', space=vmem, size = 0x4000, scoped, tag = 'output window, operand 0, single buffered']
    %12 = vsyncpa [#allocation4], 0
    %13 = vsyncpa [#allocation7], 0
    %14 = vsyncpa [#allocation5], 0
    // Predicated region
    $region2: #{tpu_custom_call.1} parent=1 // pred_check
      _
    $region3: #{tpu_custom_call.1} parent=1 // pred_check_branch
      %16 = sbr.rel (0) target = $region5
    $region4: #{tpu_custom_call.1} parent=1 // pred_region
      _
    $region5: #{tpu_custom_call.1} parent=1 // pred_fallthru
      _
    // Predicated region
    $region6: #{tpu_custom_call.1} parent=1 // pred_check
      _
    $region7: #{tpu_custom_call.1} parent=1 // pred_check_branch
      %18 = sbr.rel (0) target = $region9
    $region8: #{tpu_custom_call.1} parent=1 // pred_region
      %20 = vsyncadd [#allocation4], 0
      %s21 = sshll.u32 %s1, 4
      %s22 = int_to_ptr.hbm [resolvable:$true] %s21
      %s23 = sshll.u32 [#allocation3], 4
      %s24 = int_to_ptr.vmem [resolvable:$true] %s23
      %29 = dma.hbm_to_vmem [thread:$0]  %s22, 6144, %s24, [#allocation4], 128, 128, 8
    $region9: #{tpu_custom_call.1} parent=1 // pred_fallthru
      _
    // Predicated region
    $region10: #{tpu_custom_call.1} parent=1 // pred_check
      _
    $region11: #{tpu_custom_call.1} parent=1 // pred_check_branch
      %31 = sbr.rel (0) target = $region13
    $region12: #{tpu_custom_call.1} parent=1 // pred_region
      _
    $region13: #{tpu_custom_call.1} parent=1 // pred_fallthru
      _
    // Predicated region
    $region14: #{tpu_custom_call.1} parent=1 // pred_check
      _
    $region15: #{tpu_custom_call.1} parent=1 // pred_check_branch
      %33 = sbr.rel (0) target = $region17
    $region16: #{tpu_custom_call.1} parent=1 // pred_region
      _
    $region17: #{tpu_custom_call.1} parent=1 // pred_fallthru
      _
    // Predicated region
    $region18: #{tpu_custom_call.1} parent=1 // pred_check
      _
    $region19: #{tpu_custom_call.1} parent=1 // pred_check_branch
      %35 = sbr.rel (0) target = $region21
    $region20: #{tpu_custom_call.1} parent=1 // pred_region
      %37 = vsyncadd [#allocation7], 0
      %s38 = sshll.u32 %s4, 4
      %s39 = int_to_ptr.hbm [resolvable:$true] %s38
      %s40 = sshll.u32 [#allocation6], 4
      %s41 = int_to_ptr.vmem [resolvable:$true] %s40
      %46 = dma.hbm_to_vmem [thread:$0]  %s39, 6144, %s41, [#allocation7], 128, 128, 8
    $region21: #{tpu_custom_call.1} parent=1 // pred_fallthru
      _
    // Predicated region
    $region22: #{tpu_custom_call.1} parent=1 // pred_check
      _
    $region23: #{tpu_custom_call.1} parent=1 // pred_check_branch
      %48 = sbr.rel (0) target = $region25
    $region24: #{tpu_custom_call.1} parent=1 // pred_region
      _
    $region25: #{tpu_custom_call.1} parent=1 // pred_fallthru
      _
    // Predicated region
    $region26: #{tpu_custom_call.1} parent=1 // pred_check
      _
    $region27: #{tpu_custom_call.1} parent=1 // pred_check_branch
      %50 = sbr.rel (0) target = $region29
    $region28: #{tpu_custom_call.1} parent=1 // pred_region
      _
    $region29: #{tpu_custom_call.1} parent=1 // pred_fallthru
      _
    // Predicated region
    $region30: #{tpu_custom_call.1} parent=1 // pred_check
      _
    $region31: #{tpu_custom_call.1} parent=1 // pred_check_branch
      %52 = sbr.rel (0) target = $region33
    $region32: #{tpu_custom_call.1} parent=1 // pred_region
      %54 = dma.done [#allocation4], 6144
    $region33: #{tpu_custom_call.1} parent=1 // pred_fallthru
      _
    // Predicated region
    $region34: #{tpu_custom_call.1} parent=1 // pred_check
      _
    $region35: #{tpu_custom_call.1} parent=1 // pred_check_branch
      %56 = sbr.rel (0) target = $region37
    $region36: #{tpu_custom_call.1} parent=1 // pred_region
      %58 = dma.done [#allocation7], 6144
    $region37: #{tpu_custom_call.1} parent=1 // pred_fallthru
      _
    %v59 = vld [vmem:[%s0] sm:$0xff]
    %v60 = vld [vmem:[%s0 + $0x8] sm:$0xff]
    %v61 = vld [vmem:[%s0 + $0x10] sm:$0x3]
    %v62 = vld [vmem:[%s0 + $0x18] sm:$0xff]
    %v63 = vld [vmem:[%s0 + $0x20] sm:$0xff]
    %v64 = vld [vmem:[%s0 + $0x28] sm:$0x3]
    %65 = vst [vmem:[#allocation2] sm:$0xff] 0.0
    %66 = vst [vmem:[#allocation2 + $0x18] sm:$0xff] 0.0
    %vm73 = vcmask 1046528
    %v74 = vrot.slane %v59, 1
    %v75 = vrot.slane %v60, 1
    %v76 = vsel %vm73, %v74, %v75
    %v77 = vrot.slane %v61, 1
    %v78 = vsel %vm73, %v75, %v77
    %v79 = vrot.slane %v62, 1
    %v80 = vrot.slane %v63, 1
    %v81 = vsel %vm73, %v79, %v80
    %v82 = vrot.slane %v64, 1
    %v83 = vsel %vm73, %v80, %v82
    %vm88 = vcmask 1045504
    %v89 = vrot.slane %v59, 2
    %v90 = vrot.slane %v60, 2
    %v91 = vsel %vm88, %v89, %v90
    %v92 = vrot.slane %v61, 2
    %v93 = vsel %vm88, %v90, %v92
    %v94 = vrot.slane %v62, 2
    %v95 = vrot.slane %v63, 2
    %v96 = vsel %vm88, %v94, %v95
    %v97 = vrot.slane %v64, 2
    %v98 = vsel %vm88, %v95, %v97
    %v103 = vld [vmem:[#allocation3] sm:$0xff]
    %v104 = vld [vmem:[#allocation3 + $0x8] sm:$0xff]
    %v105 = vld [vmem:[#allocation3 + $0x10] sm:$0xff]
    %v106 = vld [vmem:[#allocation3 + $0x18] sm:$0xff]
    %v107 = vld [vmem:[#allocation3 + $0x20] sm:$0xff]
    %v108 = vld [vmem:[#allocation3 + $0x28] sm:$0xff]
    %v109 = vld [vmem:[#allocation3 + $0x30] sm:$0xff]
    %v110 = vld [vmem:[#allocation3 + $0x38] sm:$0xff]
    %v111 = vld [vmem:[#allocation3 + $0x40] sm:$0xff]
    %v112 = vld [vmem:[#allocation3 + $0x48] sm:$0xff]
    %v113 = vld [vmem:[#allocation3 + $0x50] sm:$0xff]
    %v114 = vld [vmem:[#allocation3 + $0x58] sm:$0xff]
    %v115 = vld [vmem:[#allocation3 + $0x60] sm:$0xff]
    %v116 = vld [vmem:[#allocation3 + $0x68] sm:$0xff]
    %v117 = vld [vmem:[#allocation3 + $0x70] sm:$0xff]
    %v118 = vld [vmem:[#allocation3 + $0x78] sm:$0xff]
    %v119 = vld [vmem:[#allocation3 + $0x80] sm:$0xff]
    %v120 = vld [vmem:[#allocation3 + $0x88] sm:$0xff]
    %v121 = vld [vmem:[#allocation3 + $0x90] sm:$0xff]
    %v122 = vld [vmem:[#allocation3 + $0x98] sm:$0xff]
    %v123 = vld [vmem:[#allocation3 + $0xa0] sm:$0xff]
    %v124 = vld [vmem:[#allocation3 + $0xa8] sm:$0xff]
    %v125 = vld [vmem:[#allocation3 + $0xb0] sm:$0xff]
    %v126 = vld [vmem:[#allocation3 + $0xb8] sm:$0xff]
    %v127 = vld [vmem:[#allocation3 + $0xc0] sm:$0xff]
    %v128 = vld [vmem:[#allocation3 + $0xc8] sm:$0xff]
    %v129 = vld [vmem:[#allocation3 + $0xd0] sm:$0xff]
    %v130 = vld [vmem:[#allocation3 + $0xd8] sm:$0xff]
    %v131 = vld [vmem:[#allocation3 + $0xe0] sm:$0xff]
    %v132 = vld [vmem:[#allocation3 + $0xe8] sm:$0xff]
    %v133 = vld [vmem:[#allocation3 + $0xf0] sm:$0xff]
    %v134 = vld [vmem:[#allocation3 + $0xf8] sm:$0xff]
    %v135 = vld [vmem:[#allocation3 + $0x100] sm:$0xff]
    %v136 = vld [vmem:[#allocation3 + $0x108] sm:$0xff]
    %v137 = vld [vmem:[#allocation3 + $0x110] sm:$0xff]
    %v138 = vld [vmem:[#allocation3 + $0x118] sm:$0xff]
    %v139 = vld [vmem:[#allocation3 + $0x120] sm:$0xff]
    %v140 = vld [vmem:[#allocation3 + $0x128] sm:$0xff]
    %v141 = vld [vmem:[#allocation3 + $0x130] sm:$0xff]
    %v142 = vld [vmem:[#allocation3 + $0x138] sm:$0xff]
    %v143 = vld [vmem:[#allocation3 + $0x140] sm:$0xff]
    %v144 = vld [vmem:[#allocation3 + $0x148] sm:$0xff]
    %v145 = vld [vmem:[#allocation3 + $0x150] sm:$0xff]
    %v146 = vld [vmem:[#allocation3 + $0x158] sm:$0xff]
    %v147 = vld [vmem:[#allocation3 + $0x160] sm:$0xff]
    %v148 = vld [vmem:[#allocation3 + $0x168] sm:$0xff]
    %v149 = vld [vmem:[#allocation3 + $0x170] sm:$0xff]
    %v150 = vld [vmem:[#allocation3 + $0x178] sm:$0xff]
    %v151 = vld [vmem:[%s2] sm:$0x1]
    %v153 = vperm.slane %v151, 0
    %155 = vmatpush.msra.mxu0 %v118
    %156 = vmatpush.msra.mxu0 %v117
    %157 = vmatpush.msra.mxu0 %v116
    %158 = vmatpush.msra.mxu0 %v115
    %159 = vmatpush.msra.mxu0 %v114
    %160 = vmatpush.msra.mxu0 %v113
    %161 = vmatpush.msra.mxu0 %v112
    %162 = vmatpush.msra.mxu0 %v111
    %163 = vmatpush.msra.mxu0 %v110
    %164 = vmatpush.msra.mxu0 %v109
    %165 = vmatpush.msra.mxu0 %v108
    %166 = vmatpush.msra.mxu0 %v107
    %167 = vmatpush.msra.mxu0 %v106
    %168 = vmatpush.msra.mxu0 %v105
    %169 = vmatpush.msra.mxu0 %v104
    %170 = vmatpush.msra.mxu0 %v103
    %171 = vmatmul.f32.gmra.mxu0 %v59
    %v172 = vpop.f32.mrf.mxu0
    %v173 = vadd.f32 %v153, %v172
    %174 = vmatmul.f32.gmra.mxu0 %v60
    %v175 = vpop.f32.mrf.mxu0
    %v176 = vadd.f32 %v153, %v175
    %177 = vmatmul.f32.gmra.mxu0 %v62
    %v178 = vpop.f32.mrf.mxu0
    %v179 = vadd.f32 %v153, %v178
    %180 = vmatmul.f32.gmra.mxu0 %v63
    %v181 = vpop.f32.mrf.mxu0
    %v182 = vadd.f32 %v153, %v181
    %183 = vdwg.mxu0
    %184 = vmatpush.msra.mxu0 %v134
    %185 = vmatpush.msra.mxu0 %v133
    %186 = vmatpush.msra.mxu0 %v132
    %187 = vmatpush.msra.mxu0 %v131
    %188 = vmatpush.msra.mxu0 %v130
    %189 = vmatpush.msra.mxu0 %v129
    %190 = vmatpush.msra.mxu0 %v128
    %191 = vmatpush.msra.mxu0 %v127
    %192 = vmatpush.msra.mxu0 %v126
    %193 = vmatpush.msra.mxu0 %v125
    %194 = vmatpush.msra.mxu0 %v124
    %195 = vmatpush.msra.mxu0 %v123
    %196 = vmatpush.msra.mxu0 %v122
    %197 = vmatpush.msra.mxu0 %v121
    %198 = vmatpush.msra.mxu0 %v120
    %199 = vmatpush.msra.mxu0 %v119
    %200 = vmatmul.f32.gmra.mxu0 %v76
    %v201 = vpop.f32.mrf.mxu0
    %v202 = vadd.f32 %v173, %v201
    %203 = vmatmul.f32.gmra.mxu0 %v78
    %v204 = vpop.f32.mrf.mxu0
    %v205 = vadd.f32 %v176, %v204
    %206 = vmatmul.f32.gmra.mxu0 %v81
    %v207 = vpop.f32.mrf.mxu0
    %v208 = vadd.f32 %v179, %v207
    %209 = vmatmul.f32.gmra.mxu0 %v83
    %v210 = vpop.f32.mrf.mxu0
    %v211 = vadd.f32 %v182, %v210
    %212 = vdwg.mxu0
    %213 = vmatpush.msra.mxu0 %v150
    %214 = vmatpush.msra.mxu0 %v149
    %215 = vmatpush.msra.mxu0 %v148
    %216 = vmatpush.msra.mxu0 %v147
    %217 = vmatpush.msra.mxu0 %v146
    %218 = vmatpush.msra.mxu0 %v145
    %219 = vmatpush.msra.mxu0 %v144
    %220 = vmatpush.msra.mxu0 %v143
    %221 = vmatpush.msra.mxu0 %v142
    %222 = vmatpush.msra.mxu0 %v141
    %223 = vmatpush.msra.mxu0 %v140
    %224 = vmatpush.msra.mxu0 %v139
    %225 = vmatpush.msra.mxu0 %v138
    %226 = vmatpush.msra.mxu0 %v137
    %227 = vmatpush.msra.mxu0 %v136
    %228 = vmatpush.msra.mxu0 %v135
    %229 = vmatmul.f32.gmra.mxu0 %v91
    %v230 = vpop.f32.mrf.mxu0
    %v231 = vadd.f32 %v202, %v230
    %232 = vmatmul.f32.gmra.mxu0 %v93
    %v233 = vpop.f32.mrf.mxu0
    %v234 = vadd.f32 %v205, %v233
    %235 = vmatmul.f32.gmra.mxu0 %v96
    %v236 = vpop.f32.mrf.mxu0
    %v237 = vadd.f32 %v208, %v236
    %238 = vmatmul.f32.gmra.mxu0 %v98
    %v239 = vpop.f32.mrf.mxu0
    %v240 = vadd.f32 %v211, %v239
    %241 = vdwg.mxu0
    %vm242 = vcmp.gt.f32.partialorder %v231, 0.0
    %vm243 = vcmp.gt.f32.partialorder %v234, 0.0
    %vm244 = vcmp.gt.f32.partialorder %v237, 0.0
    %vm245 = vcmp.gt.f32.partialorder %v240, 0.0
    %v246 = vld [vmem:[%s3] sm:$0x1]
    %v248 = vperm.slane %v246, 0
    %v250 = vmul.f32 %v248, %v231
    %v251 = vmul.f32 %v248, %v234
    %v252 = vmul.f32 %v248, %v237
    %v253 = vmul.f32 %v248, %v240
    %v254 = vsel %vm242, %v231, %v250
    %v255 = vsel %vm243, %v234, %v251
    %v256 = vsel %vm244, %v237, %v252
    %v257 = vsel %vm245, %v240, %v253
    %258 = vst [vmem:[#allocation2 + $0x8] sm:$0xff] %v254
    %259 = vst [vmem:[#allocation2 + $0x10] sm:$0xff] %v255
    %260 = vst [vmem:[#allocation2 + $0x20] sm:$0xff] %v256
    %261 = vst [vmem:[#allocation2 + $0x28] sm:$0xff] %v257
    %v262 = vld [vmem:[#allocation2 + $0x6] sm:$0xff]
    %v263 = vld [vmem:[#allocation2 + $0xe] sm:$0xff]
    %v264 = vld [vmem:[#allocation2 + $0x1e] sm:$0xff]
    %v265 = vld [vmem:[#allocation2 + $0x26] sm:$0xff]
    %v266 = vld [vmem:[#allocation2 + $0x7] sm:$0xff]
    %v267 = vld [vmem:[#allocation2 + $0xf] sm:$0xff]
    %v268 = vld [vmem:[#allocation2 + $0x1f] sm:$0xff]
    %v269 = vld [vmem:[#allocation2 + $0x27] sm:$0xff]
    %v270 = vld [vmem:[#allocation2 + $0x8] sm:$0xff]
    %v271 = vld [vmem:[#allocation2 + $0x10] sm:$0xff]
    %v272 = vld [vmem:[#allocation2 + $0x20] sm:$0xff]
    %v273 = vld [vmem:[#allocation2 + $0x28] sm:$0xff]
    %v274 = vld [vmem:[#allocation6] sm:$0xff]
    %v275 = vld [vmem:[#allocation6 + $0x8] sm:$0xff]
    %v276 = vld [vmem:[#allocation6 + $0x10] sm:$0xff]
    %v277 = vld [vmem:[#allocation6 + $0x18] sm:$0xff]
    %v278 = vld [vmem:[#allocation6 + $0x20] sm:$0xff]
    %v279 = vld [vmem:[#allocation6 + $0x28] sm:$0xff]
    %v280 = vld [vmem:[#allocation6 + $0x30] sm:$0xff]
    %v281 = vld [vmem:[#allocation6 + $0x38] sm:$0xff]
    %v282 = vld [vmem:[#allocation6 + $0x40] sm:$0xff]
    %v283 = vld [vmem:[#allocation6 + $0x48] sm:$0xff]
    %v284 = vld [vmem:[#allocation6 + $0x50] sm:$0xff]
    %v285 = vld [vmem:[#allocation6 + $0x58] sm:$0xff]
    %v286 = vld [vmem:[#allocation6 + $0x60] sm:$0xff]
    %v287 = vld [vmem:[#allocation6 + $0x68] sm:$0xff]
    %v288 = vld [vmem:[#allocation6 + $0x70] sm:$0xff]
    %v289 = vld [vmem:[#allocation6 + $0x78] sm:$0xff]
    %v290 = vld [vmem:[#allocation6 + $0x80] sm:$0xff]
    %v291 = vld [vmem:[#allocation6 + $0x88] sm:$0xff]
    %v292 = vld [vmem:[#allocation6 + $0x90] sm:$0xff]
    %v293 = vld [vmem:[#allocation6 + $0x98] sm:$0xff]
    %v294 = vld [vmem:[#allocation6 + $0xa0] sm:$0xff]
    %v295 = vld [vmem:[#allocation6 + $0xa8] sm:$0xff]
    %v296 = vld [vmem:[#allocation6 + $0xb0] sm:$0xff]
    %v297 = vld [vmem:[#allocation6 + $0xb8] sm:$0xff]
    %v298 = vld [vmem:[#allocation6 + $0xc0] sm:$0xff]
    %v299 = vld [vmem:[#allocation6 + $0xc8] sm:$0xff]
    %v300 = vld [vmem:[#allocation6 + $0xd0] sm:$0xff]
    %v301 = vld [vmem:[#allocation6 + $0xd8] sm:$0xff]
    %v302 = vld [vmem:[#allocation6 + $0xe0] sm:$0xff]
    %v303 = vld [vmem:[#allocation6 + $0xe8] sm:$0xff]
    %v304 = vld [vmem:[#allocation6 + $0xf0] sm:$0xff]
    %v305 = vld [vmem:[#allocation6 + $0xf8] sm:$0xff]
    %v306 = vld [vmem:[#allocation6 + $0x100] sm:$0xff]
    %v307 = vld [vmem:[#allocation6 + $0x108] sm:$0xff]
    %v308 = vld [vmem:[#allocation6 + $0x110] sm:$0xff]
    %v309 = vld [vmem:[#allocation6 + $0x118] sm:$0xff]
    %v310 = vld [vmem:[#allocation6 + $0x120] sm:$0xff]
    %v311 = vld [vmem:[#allocation6 + $0x128] sm:$0xff]
    %v312 = vld [vmem:[#allocation6 + $0x130] sm:$0xff]
    %v313 = vld [vmem:[#allocation6 + $0x138] sm:$0xff]
    %v314 = vld [vmem:[#allocation6 + $0x140] sm:$0xff]
    %v315 = vld [vmem:[#allocation6 + $0x148] sm:$0xff]
    %v316 = vld [vmem:[#allocation6 + $0x150] sm:$0xff]
    %v317 = vld [vmem:[#allocation6 + $0x158] sm:$0xff]
    %v318 = vld [vmem:[#allocation6 + $0x160] sm:$0xff]
    %v319 = vld [vmem:[#allocation6 + $0x168] sm:$0xff]
    %v320 = vld [vmem:[#allocation6 + $0x170] sm:$0xff]
    %v321 = vld [vmem:[#allocation6 + $0x178] sm:$0xff]
    %v322 = vld [vmem:[%s5] sm:$0x1]
    %v324 = vperm.slane %v322, 0
    %326 = vmatpush.msra.mxu0 %v289
    %327 = vmatpush.msra.mxu0 %v288
    %328 = vmatpush.msra.mxu0 %v287
    %329 = vmatpush.msra.mxu0 %v286
    %330 = vmatpush.msra.mxu0 %v285
    %331 = vmatpush.msra.mxu0 %v284
    %332 = vmatpush.msra.mxu0 %v283
    %333 = vmatpush.msra.mxu0 %v282
    %334 = vmatpush.msra.mxu0 %v281
    %335 = vmatpush.msra.mxu0 %v280
    %336 = vmatpush.msra.mxu0 %v279
    %337 = vmatpush.msra.mxu0 %v278
    %338 = vmatpush.msra.mxu0 %v277
    %339 = vmatpush.msra.mxu0 %v276
    %340 = vmatpush.msra.mxu0 %v275
    %341 = vmatpush.msra.mxu0 %v274
    %342 = vmatmul.f32.gmra.mxu0 %v262
    %v343 = vpop.f32.mrf.mxu0
    %v344 = vadd.f32 %v324, %v343
    %345 = vmatmul.f32.gmra.mxu0 %v263
    %v346 = vpop.f32.mrf.mxu0
    %v347 = vadd.f32 %v324, %v346
    %348 = vmatmul.f32.gmra.mxu0 %v264
    %v349 = vpop.f32.mrf.mxu0
    %v350 = vadd.f32 %v324, %v349
    %351 = vmatmul.f32.gmra.mxu0 %v265
    %v352 = vpop.f32.mrf.mxu0
    %v353 = vadd.f32 %v324, %v352
    %354 = vdwg.mxu0
    %355 = vmatpush.msra.mxu0 %v305
    %356 = vmatpush.msra.mxu0 %v304
    %357 = vmatpush.msra.mxu0 %v303
    %358 = vmatpush.msra.mxu0 %v302
    %359 = vmatpush.msra.mxu0 %v301
    %360 = vmatpush.msra.mxu0 %v300
    %361 = vmatpush.msra.mxu0 %v299
    %362 = vmatpush.msra.mxu0 %v298
    %363 = vmatpush.msra.mxu0 %v297
    %364 = vmatpush.msra.mxu0 %v296
    %365 = vmatpush.msra.mxu0 %v295
    %366 = vmatpush.msra.mxu0 %v294
    %367 = vmatpush.msra.mxu0 %v293
    %368 = vmatpush.msra.mxu0 %v292
    %369 = vmatpush.msra.mxu0 %v291
    %370 = vmatpush.msra.mxu0 %v290
    %371 = vmatmul.f32.gmra.mxu0 %v266
    %v372 = vpop.f32.mrf.mxu0
    %v373 = vadd.f32 %v344, %v372
    %374 = vmatmul.f32.gmra.mxu0 %v267
    %v375 = vpop.f32.mrf.mxu0
    %v376 = vadd.f32 %v347, %v375
    %377 = vmatmul.f32.gmra.mxu0 %v268
    %v378 = vpop.f32.mrf.mxu0
    %v379 = vadd.f32 %v350, %v378
    %380 = vmatmul.f32.gmra.mxu0 %v269
    %v381 = vpop.f32.mrf.mxu0
    %v382 = vadd.f32 %v353, %v381
    %383 = vdwg.mxu0
    %384 = vmatpush.msra.mxu0 %v321
    %385 = vmatpush.msra.mxu0 %v320
    %386 = vmatpush.msra.mxu0 %v319
    %387 = vmatpush.msra.mxu0 %v318
    %388 = vmatpush.msra.mxu0 %v317
    %389 = vmatpush.msra.mxu0 %v316
    %390 = vmatpush.msra.mxu0 %v315
    %391 = vmatpush.msra.mxu0 %v314
    %392 = vmatpush.msra.mxu0 %v313
    %393 = vmatpush.msra.mxu0 %v312
    %394 = vmatpush.msra.mxu0 %v311
    %395 = vmatpush.msra.mxu0 %v310
    %396 = vmatpush.msra.mxu0 %v309
    %397 = vmatpush.msra.mxu0 %v308
    %398 = vmatpush.msra.mxu0 %v307
    %399 = vmatpush.msra.mxu0 %v306
    %400 = vmatmul.f32.gmra.mxu0 %v270
    %v401 = vpop.f32.mrf.mxu0
    %v402 = vadd.f32 %v373, %v401
    %403 = vmatmul.f32.gmra.mxu0 %v271
    %v404 = vpop.f32.mrf.mxu0
    %v405 = vadd.f32 %v376, %v404
    %406 = vmatmul.f32.gmra.mxu0 %v272
    %v407 = vpop.f32.mrf.mxu0
    %v408 = vadd.f32 %v379, %v407
    %409 = vmatmul.f32.gmra.mxu0 %v273
    %v410 = vpop.f32.mrf.mxu0
    %v411 = vadd.f32 %v382, %v410
    %412 = vdwg.mxu0
    %vm413 = vcmp.gt.f32.partialorder %v402, 0.0
    %vm414 = vcmp.gt.f32.partialorder %v405, 0.0
    %vm415 = vcmp.gt.f32.partialorder %v408, 0.0
    %vm416 = vcmp.gt.f32.partialorder %v411, 0.0
    %v417 = vld [vmem:[%s6] sm:$0x1]
    %v419 = vperm.slane %v417, 0
    %v421 = vmul.f32 %v419, %v402
    %v422 = vmul.f32 %v419, %v405
    %v423 = vmul.f32 %v419, %v408
    %v424 = vmul.f32 %v419, %v411
    %v425 = vsel %vm413, %v402, %v421
    %v426 = vsel %vm414, %v405, %v422
    %v427 = vsel %vm415, %v408, %v423
    %v428 = vsel %vm416, %v411, %v424
    %v429 = vadd.f32 %v425, %v91
    %v430 = vadd.f32 %v426, %v93
    %v431 = vadd.f32 %v427, %v96
    %v432 = vadd.f32 %v428, %v98
    %433 = vst [vmem:[#allocation8] sm:$0xff] %v429
    %434 = vst [vmem:[#allocation8 + $0x8] sm:$0xff] %v430
    %435 = vst [vmem:[#allocation8 + $0x10] sm:$0xff] %v431
    %436 = vst [vmem:[#allocation8 + $0x18] sm:$0xff] %v432
    // Predicated region
    $region38: #{tpu_custom_call.1} parent=1 // pred_check
      _
    $region39: #{tpu_custom_call.1} parent=1 // pred_check_branch
      %438 = sbr.rel (0) target = $region41
    $region40: #{tpu_custom_call.1} parent=1 // pred_region
      %440 = vsyncadd [#allocation5], 0
      %s441 = sshll.u32 [#allocation8], 4
      %s442 = int_to_ptr.vmem [resolvable:$true] %s441
      %s443 = sshll.u32 %s7, 4
      %s444 = int_to_ptr.hbm [resolvable:$true] %s443
      %449 = dma.vmem_to_hbm [thread:$0]  %s442, 512, %s444, [#allocation5], 128, 128, 8
    $region41: #{tpu_custom_call.1} parent=1 // pred_fallthru
      _
    // Predicated region
    $region42: #{tpu_custom_call.1} parent=1 // pred_check
      _
    $region43: #{tpu_custom_call.1} parent=1 // pred_check_branch
      %451 = sbr.rel (0) target = $region45
    $region44: #{tpu_custom_call.1} parent=1 // pred_region
      %453 = dma.done [#allocation5], 512
    $region45: #{tpu_custom_call.1} parent=1 // pred_fallthru
      _
    %454 = vsyncpa [#allocation4], 1
    %455 = vsyncpa [#allocation7], 1
    %456 = vsyncpa [#allocation5], 1

</llo_original>
